<compile_context>
chip_gen: v6e
topology: v6e:2x2x1
jax: 0.10.0
libtpu: 0.0.40
codegen_flags: <defaults>
</compile_context>

<pallas_src>
from collections import namedtuple

import jax
import jax.numpy as jnp
from jax import lax
from jax.experimental import pallas as pl
from jax.experimental.pallas import tpu as pltpu

_VMEM_LIMIT = 32 * 1024 * 1024


# -----------------------------------------------------------------------------
# Encoder kernel: fused input-projection prologue + bidirectional LSTM recurrence
# -----------------------------------------------------------------------------
def _encoder_kernel(emb_ref, wih_ref, b_ref, whh_ref,
                    out_ref, hN_ref, cN_ref, xg_scr):
    """One grid step = one LSTM direction; the full time loop runs in-kernel.

    emb_ref : (S*B, E)  f32   shared embeddings (same block both directions)
    wih_ref : (E, 4Hd)  bf16  this direction's input-to-hidden weights
    b_ref   : (1, 4Hd)  f32   this direction's bias
    whh_ref : (Hd, 4Hd) bf16  this direction's hidden-to-hidden weights
    out_ref : (S, B, Hd)      this direction's half of the (S,B,2Hd) context
    """
    d = pl.program_id(0)                      # 0 = forward, 1 = backward
    S, B, Hd = out_ref.shape

    # --- prologue: hoisted input-to-hidden projection (one MXU matmul, VMEM only)
    # TODO(synk): at production T*B/E, tile this matmul (M blocks, K>=128) and
    # store xg in bf16 to halve VMEM residency.
    xg_scr[...] = (jnp.dot(emb_ref[...].astype(wih_ref.dtype), wih_ref[...],
                           preferred_element_type=jnp.float32) + b_ref[...])
    whh = whh_ref[...]

    def step(t, carry):
        h, c = carry
        # forward walks t = 0..S-1; backward walks S-1..0 (pure index arithmetic,
        # no reversed HBM copies).
        idx = t + d * (S - 1 - 2 * t)
        row = pl.multiple_of(idx * B, B)
        gates = (xg_scr[pl.ds(row, B), :]
                 + jnp.dot(h.astype(whh.dtype), whh,
                           preferred_element_type=jnp.float32))
        # gate layout (i | f | o | g): one contiguous sigmoid (B,3Hd), one tanh (B,Hd)
        ifo = jax.nn.sigmoid(gates[:, :3 * Hd])
        g = jnp.tanh(gates[:, 3 * Hd:])
        c_new = ifo[:, Hd:2 * Hd] * c + ifo[:, :Hd] * g
        h_new = ifo[:, 2 * Hd:3 * Hd] * jnp.tanh(c_new)
        out_ref[idx] = h_new
        return h_new, c_new

    zeros = jnp.zeros((B, Hd), jnp.float32)
    h_fin, c_fin = lax.fori_loop(0, S, step, (zeros, zeros))
    hN_ref[...] = h_fin                       # final states written once
    cN_ref[...] = c_fin


def encoder_run(emb_flat, wih_stack, b_stack, whh_stack, S, B):
    """emb_flat (S*B,E) f32; wih_stack (2,E,4Hd) bf16; b_stack (2,1,4Hd) f32;
    whh_stack (2,Hd,4Hd) bf16.
    Returns context (S,B,2Hd) f32, hN (2,B,Hd) f32, cN (2,B,Hd) f32."""
    D, E, G = wih_stack.shape
    Hd = G // 4
    # TODO(synk): on v7x use CORE_PARALLEL (or pl.core_map) on the direction axis
    # so the two directions genuinely land on both TensorCores; time-tile S at
    # production sizes so xg/out stream through VMEM in chunks.
    grid_spec = pltpu.PrefetchScalarGridSpec(
        num_scalar_prefetch=0, grid=(D,),
        in_specs=[pl.BlockSpec((S * B, E), lambda d: (0, 0)),
                  pl.BlockSpec((None, E, G), lambda d: (d, 0, 0)),
                  pl.BlockSpec((None, 1, G), lambda d: (d, 0, 0)),
                  pl.BlockSpec((None, Hd, G), lambda d: (d, 0, 0))],
        out_specs=[pl.BlockSpec((S, B, Hd), lambda d: (0, 0, d)),
                   pl.BlockSpec((None, B, Hd), lambda d: (d, 0, 0)),
                   pl.BlockSpec((None, B, Hd), lambda d: (d, 0, 0))],
        scratch_shapes=[pltpu.VMEM((S * B, G), jnp.float32)])
    out_shape = (jax.ShapeDtypeStruct((S, B, 2 * Hd), jnp.float32),
                 jax.ShapeDtypeStruct((D, B, Hd), jnp.float32),
                 jax.ShapeDtypeStruct((D, B, Hd), jnp.float32))
    return pl.pallas_call(
        _encoder_kernel, out_shape=out_shape, grid_spec=grid_spec,
        compiler_params=pltpu.CompilerParams(
            dimension_semantics=("parallel",),
            vmem_limit_bytes=_VMEM_LIMIT),
    )(emb_flat, wih_stack, b_stack, whh_stack)


# -----------------------------------------------------------------------------
# Decoder kernel: fused input-projection + context-transpose prologue,
# input-feed LSTM + global (dot) attention with merged per-step matmuls.
# -----------------------------------------------------------------------------
def _decoder_kernel(emb_ref, ctx_ref, mask_ref, h0_ref, c0_ref, feed0_ref,
                    wih_e_ref, b_ref, w_rec_ref, w_out_ref,
                    out_ref, attn_ref, hN_ref, cN_ref,
                    xg_scr, ctxT_scr):
    T, B, H = out_ref.shape
    S = ctx_ref.shape[1]

    # --- prologue 1: hoisted input-to-hidden projection for all timesteps
    xg_scr[...] = (jnp.dot(emb_ref[...].astype(wih_e_ref.dtype), wih_e_ref[...],
                           preferred_element_type=jnp.float32) + b_ref[...])
    # --- prologue 2: hoisted context transpose (B,S,H) -> (B,H,S), paid once
    # (per-batch 2-D f32 minor transpose; keeps the per-step score matmul in the
    # MXU-native (K on second-minor, N on lanes) orientation).
    for bi in range(B):
        ctxT_scr[bi] = jnp.transpose(
            ctx_ref[bi].astype(jnp.float32)).astype(ctxT_scr.dtype)

    ctx = ctx_ref[...]          # (B,S,H) bf16 -- context-vector matmul operand
    ctxT = ctxT_scr[...]        # (B,H,S) bf16 -- scores matmul operand
    mask = mask_ref[...]        # (B,S) f32 additive bias (0 / -1e9)
    w_rec = w_rec_ref[...]      # (2H,4H) bf16, rows = [W_ih_feed ; W_hh]
    w_out = w_out_ref[...]      # (2H,H)  bf16, rows = [W_out_c  ; W_out_h]
    # TODO(synk): for production S/H, time-tile T and S (online softmax) so
    # xg/ctx/attn stream through VMEM instead of being fully resident; on v7x
    # add a CORE_PARALLEL batch-half grid axis so both TensorCores are busy.

    def step(t, carry):
        h, c, feed = carry
        # input-feed LSTM gates: ONE deep MXU matmul over [feed ; h]  (K = 2H)
        fh = jnp.concatenate([feed, h], axis=1).astype(w_rec.dtype)
        row = pl.multiple_of(t * B, B)
        gates = (xg_scr[pl.ds(row, B), :]
                 + jnp.dot(fh, w_rec, preferred_element_type=jnp.float32))
        # gate layout (i | f | o | g)
        ifo = jax.nn.sigmoid(gates[:, :3 * H])
        g = jnp.tanh(gates[:, 3 * H:])
        c_new = ifo[:, H:2 * H] * c + ifo[:, :H] * g
        h_new = ifo[:, 2 * H:3 * H] * jnp.tanh(c_new)

        # global dot attention (batched MXU matmuls, length-masked softmax)
        q = h_new.astype(ctxT.dtype)[:, None, :]                          # (B,1,H)
        scores = jnp.einsum('bqh,bhs->bqs', q, ctxT,
                            preferred_element_type=jnp.float32)[:, 0, :]  # (B,S)
        scores = scores + mask
        scores = scores - jnp.max(scores, axis=1, keepdims=True)
        e = jnp.exp(scores)
        align = e * pl.reciprocal(jnp.sum(e, axis=1, keepdims=True), approx=True)
        p = align.astype(ctx.dtype)[:, None, :]                           # (B,1,S)
        cvec = jnp.einsum('bqs,bsh->bqh', p, ctx,
                          preferred_element_type=jnp.float32)[:, 0, :]    # (B,H)
        # linear_out([cvec ; h_new]) + tanh: ONE deep MXU matmul (K = 2H)
        ch = jnp.concatenate([cvec, h_new], axis=1).astype(w_out.dtype)
        attn_h = jnp.tanh(jnp.dot(ch, w_out, preferred_element_type=jnp.float32))

        out_ref[t] = attn_h
        # TODO(synk): attn last dim S is not lane-dense (masked vst); pad S to a
        # multiple of 128 or buffer align rows and store a lane-dense slab per chunk.
        attn_ref[t] = align
        return h_new, c_new, attn_h

    h_fin, c_fin, _ = lax.fori_loop(
        0, T, step, (h0_ref[...], c0_ref[...], feed0_ref[...]))
    hN_ref[...] = h_fin
    cN_ref[...] = c_fin


def decoder_run(emb_flat, ctx_bsh, mask, h0, c0, feed0,
                wih_e, b, w_rec, w_out, T, B):
    E = emb_flat.shape[1]
    H = h0.shape[1]
    S = ctx_bsh.shape[1]
    G = 4 * H

    def full(shp):
        return pl.BlockSpec(shp, lambda i, _n=len(shp): (0,) * _n)

    # TODO(synk): once a multi-step grid axis exists, mark the loop-invariant
    # inputs (weights, ctx, mask) with pipeline_mode=pl.Buffered(1).
    grid_spec = pltpu.PrefetchScalarGridSpec(
        num_scalar_prefetch=0, grid=(1,),
        in_specs=[full((T * B, E)), full((B, S, H)), full((B, S)),
                  full((B, H)), full((B, H)), full((B, H)),
                  full((E, G)), full((1, G)), full((2 * H, G)), full((2 * H, H))],
        out_specs=[full((T, B, H)), full((T, B, S)),
                   full((B, H)), full((B, H))],
        scratch_shapes=[pltpu.VMEM((T * B, G), jnp.float32),
                        pltpu.VMEM((B, H, S), jnp.bfloat16)])
    out_shape = (jax.ShapeDtypeStruct((T, B, H), jnp.float32),
                 jax.ShapeDtypeStruct((T, B, S), jnp.float32),
                 jax.ShapeDtypeStruct((B, H), jnp.float32),
                 jax.ShapeDtypeStruct((B, H), jnp.float32))
    return pl.pallas_call(
        _decoder_kernel, out_shape=out_shape, grid_spec=grid_spec,
        compiler_params=pltpu.CompilerParams(
            dimension_semantics=("arbitrary",),
            vmem_limit_bytes=_VMEM_LIMIT),
    )(emb_flat, ctx_bsh, mask, h0, c0, feed0, wih_e, b, w_rec, w_out)


# -----------------------------------------------------------------------------
# Model glue (plain JAX): params, embedding gathers, _fix_enc_hidden
# -----------------------------------------------------------------------------
def uinit(key, shape, scale=0.1):
    return jax.random.uniform(key, shape, dtype=jnp.float32,
                              minval=-scale, maxval=scale)


class Encoder:
    """Embedding + 1-layer bidirectional LSTM (rnn_size split across directions)."""

    def __init__(self, key, vocab, emb_dim, rnn_size):
        self.num_directions = 2
        self.hidden_size = rnn_size // self.num_directions
        Hd = self.hidden_size
        ks = jax.random.split(key, 7)
        self.embedding = uinit(ks[0], (vocab, emb_dim))
        # gate columns laid out (i | f | o | g)
        self.wih = jnp.stack([uinit(ks[1], (emb_dim, 4 * Hd)),
                              uinit(ks[2], (emb_dim, 4 * Hd))])      # (2,E,4Hd)
        self.whh = jnp.stack([uinit(ks[3], (Hd, 4 * Hd)),
                              uinit(ks[4], (Hd, 4 * Hd))])           # (2,Hd,4Hd)
        self.b = jnp.stack([uinit(ks[5], (1, 4 * Hd)),
                            uinit(ks[6], (1, 4 * Hd))])              # (2,1,4Hd)
        self.wih_bf = self.wih.astype(jnp.bfloat16)
        self.whh_bf = self.whh.astype(jnp.bfloat16)

    def __call__(self, src, lengths):
        # TODO(synk): pack_padded_sequence semantics (length-gated backward
        # recurrence / per-sequence final states) are not implemented; src
        # sequences are treated as full length inside the encoder.
        S, B = src.shape
        emb = jnp.take(self.embedding, src, axis=0)                   # (S,B,E)
        context, hN, cN = encoder_run(
            emb.reshape(S * B, -1), self.wih_bf, self.b, self.whh_bf, S, B)
        return (hN, cN), context                                      # (S,B,2Hd)


class Decoder:
    """Embedding + 1-layer input-feed LSTM + global (dot) attention."""

    def __init__(self, key, vocab, emb_dim, rnn_size):
        self.hidden_size = rnn_size
        self.decoder_layer = 'rnn'
        H = rnn_size
        ks = jax.random.split(key, 7)
        self.embedding = uinit(ks[0], (vocab, emb_dim))
        # gate columns laid out (i | f | o | g)
        self.wih_e = uinit(ks[1], (emb_dim, 4 * H))
        self.wih_f = uinit(ks[2], (H, 4 * H))
        self.whh = uinit(ks[3], (H, 4 * H))
        self.b = uinit(ks[4], (1, 4 * H))
        self.wout_c = uinit(ks[5], (H, H))
        self.wout_h = uinit(ks[6], (H, H))
        # bf16 MXU operands; recurrent matmuls pre-merged (K = 2H)
        self.wih_e_bf = self.wih_e.astype(jnp.bfloat16)
        self.w_rec_bf = jnp.concatenate([self.wih_f, self.whh],
                                        axis=0).astype(jnp.bfloat16)   # (2H,4H)
        self.w_out_bf = jnp.concatenate([self.wout_c, self.wout_h],
                                        axis=0).astype(jnp.bfloat16)   # (2H,H)

    def __call__(self, tgt, src, enc_hidden, context, init_output,
                 src_lengths=None):
        T, B = tgt.shape
        H = self.hidden_size
        S = context.shape[0]
        emb = jnp.take(self.embedding, tgt, axis=0)                   # (T,B,E)
        # TODO(synk): embedding gather could be fused via scalar prefetch +
        # pl.Element row gather; kept as a wrapper-level jnp.take here.
        h0, c0 = enc_hidden[0][0], enc_hidden[1][0]                   # (B,H)
        # TODO(synk): the (B,S,H) bf16 copy could be emitted directly by the
        # encoder kernel as a second output to avoid this small wrapper transpose.
        ctx_bsh = jnp.transpose(context, (1, 0, 2)).astype(jnp.bfloat16)
        if src_lengths is None:
            mask = jnp.zeros((B, S), jnp.float32)
        else:
            mask = jnp.where(jnp.arange(S)[None, :] < src_lengths[:, None],
                             0.0, -1e9).astype(jnp.float32)
        out, attn, hN, cN = decoder_run(
            emb.reshape(T * B, -1), ctx_bsh, mask, h0, c0, init_output,
            self.wih_e_bf, self.b, self.w_rec_bf, self.w_out_bf, T, B)
        dec_hidden = (hN[None], cN[None])                             # (1,B,H) x2
        attns = {'std': attn}                                         # (T,B,S)
        return out, dec_hidden, attns


Batch = namedtuple("Batch", ["src", "tgt", "lengths"])


class NMTModel:
    def __init__(self, encoder, decoder):
        self.encoder = encoder
        self.decoder = decoder

    def make_init_decoder_output(self, context):
        batch_size = context.shape[1]
        return jnp.zeros((batch_size, self.decoder.hidden_size), jnp.float32)

    def _fix_enc_hidden(self, h):
        # (layers*directions, B, D) -> (layers, B, directions*D)
        if self.encoder.num_directions == 2:
            L2, B, D = h.shape
            h = h.reshape(L2 // 2, 2, B, D)
            h = jnp.transpose(h, (0, 2, 1, 3))
            return h.reshape(L2 // 2, B, D * 2)
        return h

    def setup_decoder(self, enc_hidden):
        if self.decoder.decoder_layer == 'transformer':
            return None
        if isinstance(enc_hidden, tuple):
            return tuple(self._fix_enc_hidden(x) for x in enc_hidden)
        return self._fix_enc_hidden(enc_hidden)

    def forward(self, input, dec_hidden=None):
        src = input.src
        tgt = input.tgt[:-1]
        enc_hidden, context = self.encoder(src, input.lengths)
        init_output = self.make_init_decoder_output(context)
        enc_hidden = self.setup_decoder(enc_hidden)
        out, dec_hidden, attns = self.decoder(
            tgt, src, enc_hidden if dec_hidden is None else dec_hidden,
            context, init_output, src_lengths=input.lengths)
        return out, attns, dec_hidden


# -----------------------------------------------------------------------------
if __name__ == "__main__":
    key = jax.random.PRNGKey(0)
    k_enc, k_dec, k_src, k_tgt = jax.random.split(key, 4)

    S, T_full, B = 8, 7, 8            # src_len, tgt_len (incl. BOS row), batch
    V_SRC, V_TGT, EMB, RNN = 16, 16, 64, 256   # RNN=256 -> Hd=128 lane-aligned halves

    encoder = Encoder(k_enc, V_SRC, EMB, RNN)
    decoder = Decoder(k_dec, V_TGT, EMB, RNN)
    model = NMTModel(encoder, decoder)

    src = jax.random.randint(k_src, (S, B), 0, V_SRC)
    tgt = jax.random.randint(k_tgt, (T_full, B), 0, V_TGT)
    lengths = jnp.full((B,), S, dtype=jnp.int32)
    batch = Batch(src=src, tgt=tgt, lengths=lengths)

    out, attns, dec_hidden = model.forward(batch)
    jax.block_until_ready((out, attns['std'], dec_hidden))

    assert out.shape == (T_full - 1, B, RNN)
    assert attns['std'].shape == (T_full - 1, B, S)
    assert dec_hidden[0].shape == (1, B, RNN) and dec_hidden[1].shape == (1, B, RNN)
    assert bool(jnp.all(jnp.isfinite(out)))
    assert bool(jnp.all(jnp.isfinite(attns['std'])))
    # attention rows sum to ~1 (approx reciprocal in the softmax denominator)
    row_sums = jnp.sum(attns['std'], axis=-1)
    assert bool(jnp.all(jnp.abs(row_sums - 1.0) < 5e-2))
    print("KERNEL_OK")
</pallas_src>

<mosaic_0001>
module attributes {stable_mosaic.version = 11 : i64} {
  func.func @_encoder_kernel(%arg0: i32, %arg1: memref<64x64xf32, #tpu.memory_space<vmem>>, %arg2: memref<1x64x512xbf16, #tpu.memory_space<vmem>>, %arg3: memref<1x1x512xf32, #tpu.memory_space<vmem>>, %arg4: memref<1x128x512xbf16, #tpu.memory_space<vmem>>, %arg5: memref<8x8x128xf32, #tpu.memory_space<vmem>>, %arg6: memref<1x8x128xf32, #tpu.memory_space<vmem>>, %arg7: memref<1x8x128xf32, #tpu.memory_space<vmem>>, %arg8: memref<64x512xf32, #tpu.memory_space<vmem>>) attributes {dimension_semantics = [#tpu.dimension_semantics<parallel>], iteration_bounds = array<i64: 2>, scalar_prefetch = 0 : i64, scratch_operands = 1 : i64, tpu.core_type = #tpu.core_type<tc>, window_params = [{pipeline_mode = #tpu.pipeline_mode<synchronous>, transform_indices = @transform_0, window_bounds = array<i64: 64, 64>}, {transform_indices = @transform_1, window_bounds = array<i64: 1, 64, 512>}, {transform_indices = @transform_2, window_bounds = array<i64: 1, 1, 512>}, {transform_indices = @transform_3, window_bounds = array<i64: 1, 128, 512>}, {transform_indices = @transform_4, window_bounds = array<i64: 8, 8, 128>}, {transform_indices = @transform_5, window_bounds = array<i64: 1, 8, 128>}, {transform_indices = @transform_6, window_bounds = array<i64: 1, 8, 128>}]} {
    %c0 = arith.constant 0 : index
    %c0_0 = arith.constant 0 : index
    %0 = vector.load %arg1[%c0, %c0_0] : memref<64x64xf32, #tpu.memory_space<vmem>>, vector<64x64xf32>
    %1 = arith.truncf %0 : vector<64x64xf32> to vector<64x64xbf16>
    %c0_1 = arith.constant 0 : index
    %c0_2 = arith.constant 0 : index
    %c0_3 = arith.constant 0 : index
    %2 = vector.load %arg2[%c0_1, %c0_2, %c0_3] : memref<1x64x512xbf16, #tpu.memory_space<vmem>>, vector<1x64x512xbf16>
    %3 = vector.shape_cast %2 : vector<1x64x512xbf16> to vector<64x512xbf16>
    %cst = arith.constant dense<0.000000e+00> : vector<64x512xf32>
    %4 = tpu.matmul %1, %3, %cst {dimension_numbers = #tpu.dot_dimension_numbers<[1], [0], [0], [1], [0, 0, 1, 1], [], []>} : vector<64x64xbf16>, vector<64x512xbf16>, vector<64x512xf32> -> vector<64x512xf32>
    %c0_4 = arith.constant 0 : index
    %c0_5 = arith.constant 0 : index
    %c0_6 = arith.constant 0 : index
    %5 = vector.load %arg3[%c0_4, %c0_5, %c0_6] : memref<1x1x512xf32, #tpu.memory_space<vmem>>, vector<1x1x512xf32>
    %6 = vector.shape_cast %5 : vector<1x1x512xf32> to vector<1x512xf32>
    %7 = vector.broadcast %6 : vector<1x512xf32> to vector<64x512xf32>
    %8 = arith.addf %4, %7 : vector<64x512xf32>
    %c0_7 = arith.constant 0 : index
    %c0_8 = arith.constant 0 : index
    %9 = vector.load %arg8[%c0_7, %c0_8] : memref<64x512xf32, #tpu.memory_space<vmem>>, vector<64x512xf32>
    tpu.vector_store %arg8[%c0_7, %c0_8], %8 {strides = array<i32>} : memref<64x512xf32, #tpu.memory_space<vmem>>, vector<64x512xf32>,
    %c0_9 = arith.constant 0 : index
    %c0_10 = arith.constant 0 : index
    %c0_11 = arith.constant 0 : index
    %10 = vector.load %arg4[%c0_9, %c0_10, %c0_11] : memref<1x128x512xbf16, #tpu.memory_space<vmem>>, vector<1x128x512xbf16>
    %11 = vector.shape_cast %10 : vector<1x128x512xbf16> to vector<128x512xbf16>
    %cst_12 = arith.constant 0.000000e+00 : f32
    %12 = vector.broadcast %cst_12 : f32 to vector<8x128xf32>
    %c0_i32 = arith.constant 0 : i32
    %c8_i32 = arith.constant 8 : i32
    %13 = arith.addi %c0_i32, %c8_i32 : i32
    %c1_i32 = arith.constant 1 : i32
    %14:2 = scf.for %arg9 = %c0_i32 to %13 step %c1_i32 iter_args(%arg10 = %12, %arg11 = %12) -> (vector<8x128xf32>, vector<8x128xf32>)  : i32 {
      %c2_i32 = arith.constant 2 : i32
      %21 = arith.muli %c2_i32, %arg9 : i32
      %c7_i32 = arith.constant 7 : i32
      %22 = arith.subi %c7_i32, %21 : i32
      %23 = arith.muli %arg0, %22 : i32
      %24 = arith.addi %arg9, %23 : i32
      %c8_i32_20 = arith.constant 8 : i32
      %25 = arith.muli %24, %c8_i32_20 : i32
      %26 = tpu.assume_multiple %25, 8 : i32
      %27 = arith.index_cast %26 : i32 to index
      %c0_21 = arith.constant 0 : index
      %28 = vector.load %arg8[%27, %c0_21] : memref<64x512xf32, #tpu.memory_space<vmem>>, vector<8x512xf32>
      %29 = arith.truncf %arg10 : vector<8x128xf32> to vector<8x128xbf16>
      %cst_22 = arith.constant dense<0.000000e+00> : vector<8x512xf32>
      %30 = tpu.matmul %29, %11, %cst_22 {dimension_numbers = #tpu.dot_dimension_numbers<[1], [0], [0], [1], [0, 0, 1, 1], [], []>} : vector<8x128xbf16>, vector<128x512xbf16>, vector<8x512xf32> -> vector<8x512xf32>
      %31 = arith.addf %28, %30 : vector<8x512xf32>
      %32 = vector.extract_strided_slice %31 {offsets = [0, 0], sizes = [8, 384], strides = [1, 1]} : vector<8x512xf32> to vector<8x384xf32>
      %33 = arith.negf %32 : vector<8x384xf32>
      %34 = math.exp %33 : vector<8x384xf32>
      %cst_23 = arith.constant 1.000000e+00 : f32
      %35 = vector.broadcast %cst_23 : f32 to vector<8x384xf32>
      %36 = arith.addf %35, %34 : vector<8x384xf32>
      %37 = arith.divf %35, %36 : vector<8x384xf32>
      %38 = vector.extract_strided_slice %31 {offsets = [0, 384], sizes = [8, 128], strides = [1, 1]} : vector<8x512xf32> to vector<8x128xf32>
      %39 = math.tanh %38 : vector<8x128xf32>
      %40 = vector.extract_strided_slice %37 {offsets = [0, 128], sizes = [8, 128], strides = [1, 1]} : vector<8x384xf32> to vector<8x128xf32>
      %41 = arith.mulf %40, %arg11 : vector<8x128xf32>
      %42 = vector.extract_strided_slice %37 {offsets = [0, 0], sizes = [8, 128], strides = [1, 1]} : vector<8x384xf32> to vector<8x128xf32>
      %43 = arith.mulf %42, %39 : vector<8x128xf32>
      %44 = arith.addf %41, %43 : vector<8x128xf32>
      %45 = vector.extract_strided_slice %37 {offsets = [0, 256], sizes = [8, 128], strides = [1, 1]} : vector<8x384xf32> to vector<8x128xf32>
      %46 = math.tanh %44 : vector<8x128xf32>
      %47 = arith.mulf %45, %46 : vector<8x128xf32>
      %48 = arith.index_cast %24 : i32 to index
      %c0_24 = arith.constant 0 : index
      %c0_25 = arith.constant 0 : index
      %49 = vector.load %arg5[%48, %c0_24, %c0_25] : memref<8x8x128xf32, #tpu.memory_space<vmem>>, vector<1x8x128xf32>
      %50 = vector.shape_cast %49 : vector<1x8x128xf32> to vector<8x128xf32>
      %51 = vector.shape_cast %47 : vector<8x128xf32> to vector<1x8x128xf32>
      tpu.vector_store %arg5[%48, %c0_24, %c0_25], %51 {strides = array<i32>} : memref<8x8x128xf32, #tpu.memory_space<vmem>>, vector<1x8x128xf32>,
      scf.yield %47, %44 : vector<8x128xf32>, vector<8x128xf32>
    }
    %c8_i32_13 = arith.constant 8 : i32
    %c0_14 = arith.constant 0 : index
    %c0_15 = arith.constant 0 : index
    %c0_16 = arith.constant 0 : index
    %15 = vector.load %arg6[%c0_14, %c0_15, %c0_16] : memref<1x8x128xf32, #tpu.memory_space<vmem>>, vector<1x8x128xf32>
    %16 = vector.shape_cast %15 : vector<1x8x128xf32> to vector<8x128xf32>
    %17 = vector.shape_cast %14#0 : vector<8x128xf32> to vector<1x8x128xf32>
    tpu.vector_store %arg6[%c0_14, %c0_15, %c0_16], %17 {strides = array<i32>} : memref<1x8x128xf32, #tpu.memory_space<vmem>>, vector<1x8x128xf32>,
    %c0_17 = arith.constant 0 : index
    %c0_18 = arith.constant 0 : index
    %c0_19 = arith.constant 0 : index
    %18 = vector.load %arg7[%c0_17, %c0_18, %c0_19] : memref<1x8x128xf32, #tpu.memory_space<vmem>>, vector<1x8x128xf32>
    %19 = vector.shape_cast %18 : vector<1x8x128xf32> to vector<8x128xf32>
    %20 = vector.shape_cast %14#1 : vector<8x128xf32> to vector<1x8x128xf32>
    tpu.vector_store %arg7[%c0_17, %c0_18, %c0_19], %20 {strides = array<i32>} : memref<1x8x128xf32, #tpu.memory_space<vmem>>, vector<1x8x128xf32>,
    return
  }
  func.func @transform_0(%arg0: i32) -> (i32, i32) {
    %c0_i32 = arith.constant 0 : i32
    %c0_i32_0 = arith.constant 0 : i32
    %c0_i32_1 = arith.constant 0 : i32
    return %c0_i32, %c0_i32_0 : i32, i32
  }
  func.func @transform_1(%arg0: i32) -> (i32, i32, i32) {
    %c0_i32 = arith.constant 0 : i32
    %c0_i32_0 = arith.constant 0 : i32
    %c0_i32_1 = arith.constant 0 : i32
    return %arg0, %c0_i32, %c0_i32_0 : i32, i32, i32
  }
  func.func @transform_2(%arg0: i32) -> (i32, i32, i32) {
    %c0_i32 = arith.constant 0 : i32
    %c0_i32_0 = arith.constant 0 : i32
    %c0_i32_1 = arith.constant 0 : i32
    return %arg0, %c0_i32, %c0_i32_0 : i32, i32, i32
  }
  func.func @transform_3(%arg0: i32) -> (i32, i32, i32) {
    %c0_i32 = arith.constant 0 : i32
    %c0_i32_0 = arith.constant 0 : i32
    %c0_i32_1 = arith.constant 0 : i32
    return %arg0, %c0_i32, %c0_i32_0 : i32, i32, i32
  }
  func.func @transform_4(%arg0: i32) -> (i32, i32, i32) {
    %c0_i32 = arith.constant 0 : i32
    %c0_i32_0 = arith.constant 0 : i32
    %c0_i32_1 = arith.constant 0 : i32
    return %c0_i32, %c0_i32_0, %arg0 : i32, i32, i32
  }
  func.func @transform_5(%arg0: i32) -> (i32, i32, i32) {
    %c0_i32 = arith.constant 0 : i32
    %c0_i32_0 = arith.constant 0 : i32
    %c0_i32_1 = arith.constant 0 : i32
    return %arg0, %c0_i32, %c0_i32_0 : i32, i32, i32
  }
  func.func @transform_6(%arg0: i32) -> (i32, i32, i32) {
    %c0_i32 = arith.constant 0 : i32
    %c0_i32_0 = arith.constant 0 : i32
    %c0_i32_1 = arith.constant 0 : i32
    return %arg0, %c0_i32, %c0_i32_0 : i32, i32, i32
  }
}

</mosaic_0001>

<llo_original>
// kernel: tpu_custom_call.1
$region0: #{tpu_custom_call.1}
  #allocation0 [shape = 'u32[]', space=smem, size = 0x4, offset = 0x4, fixed_abs, tag = 'smem constant byte address 0x4 - core index']
  #allocation1 [shape = 'u32[144,128]{1,0:T(1,128)}', space=vmem, size = 0x12000, scoped, tag = 'internal scratch']
  #allocation2 [shape = 'f32[64,512]{1,0:T(8,128)}', space=vmem, size = 0x20000, scoped, tag = 'scratch operand']
  %s0 = inlined_call_operand.hbm [shape: f32[64,64], index: 0, kind: input, shape index: {}]
  %s1 = inlined_call_operand.hbm [shape: bf16[2,64,512], index: 1, kind: input, shape index: {}]
  %s2 = inlined_call_operand.hbm [shape: f32[2,1,512], index: 2, kind: input, shape index: {}]
  %s3 = inlined_call_operand.hbm [shape: bf16[2,128,512], index: 3, kind: input, shape index: {}]
  %s4 = inlined_call_operand.hbm [shape: f32[8,8,256], index: 4, kind: output, shape index: {0}]
  %s5 = inlined_call_operand.hbm [shape: f32[2,8,128], index: 5, kind: output, shape index: {1}]
  %s6 = inlined_call_operand.hbm [shape: f32[2,8,128], index: 6, kind: output, shape index: {2}]
  %7 = xla_tuple %s4, %s5, %s6
  %s8 = sld [smem:[#allocation0]]
  $region88: #{tpu_custom_call.1} parent=0
    _
  %s10 = ssub.s32 1, %s8
  %s11 = scalar_select 0, %s10, %s8
  $region1: #{tpu_custom_call.1} parent=0
    #allocation3 [shape = 'u8[32768]{0}', space=vmem, size = 0x8000, scoped, tag = 'input window, operand 0, single buffered']
    #allocation4 [shape = 's32[2]{0}', space=sflag, size = 0x8, scoped, tag = 'scoped memory for tpu_custom_call.1']
    #allocation5 [shape = 's32[2]{0}', space=sflag, size = 0x8, scoped, tag = 'scoped memory for tpu_custom_call.1']
    #allocation6 [shape = 'u8[131072]{0}', space=vmem, size = 0x20000, scoped, tag = 'input window, operand 1']
    #allocation7 [shape = 's32[2]{0}', space=sflag, size = 0x8, scoped, tag = 'scoped memory for tpu_custom_call.1']
    #allocation8 [shape = 'u8[4096]{0}', space=vmem, size = 0x1000, scoped, tag = 'input window, operand 2']
    #allocation9 [shape = 'u8[262144]{0}', space=vmem, size = 0x40000, scoped, tag = 'input window, operand 3']
    #allocation10 [shape = 's32[2]{0}', space=sflag, size = 0x8, scoped, tag = 'scoped memory for tpu_custom_call.1']
    #allocation11 [shape = 'u8[65536]{0}', space=vmem, size = 0x10000, scoped, tag = 'output window, operand 0']
    #allocation12 [shape = 'u8[8192]{0}', space=vmem, size = 0x2000, scoped, tag = 'output window, operand 1']
    #allocation13 [shape = 's32[2]{0}', space=sflag, size = 0x8, scoped, tag = 'scoped memory for tpu_custom_call.1']
    #allocation14 [shape = 'u8[8192]{0}', space=vmem, size = 0x2000, scoped, tag = 'output window, operand 2']
    %12 = vsyncpa [#allocation4], 0
    %13 = vsyncpa [#allocation7], 0
    %s14 = scalar_lea.sflag [#allocation7], 1
    %15 = vsyncpa %s14, 0
    %16 = vsyncpa [#allocation10], 0
    %s17 = scalar_lea.sflag [#allocation10], 1
    %18 = vsyncpa %s17, 0
    %19 = vsyncpa [#allocation5], 0
    %s20 = scalar_lea.sflag [#allocation5], 1
    %21 = vsyncpa %s20, 0
    %22 = vsyncpa [#allocation13], 0
    %s23 = scalar_lea.sflag [#allocation13], 1
    %24 = vsyncpa %s23, 0
    loop: start=0, step=1, limit=4
    $region2: #{tpu_custom_call.1} parent=1 // loop_pre_header
      _
    $region3: #{tpu_custom_call.1} parent=1 // loop_header
      %s26 = sphi 0, %s30
      %p27 = scmp.ge.s32.totalorder %s26, 4
      %s34 = sphi 0, %s34
      %s36 = sphi 0, %s34
      %s37 = sphi 0, %s36
      %s51 = sphi 0, %s37
      %s57 = sphi 0, %s59
      %s60 = sphi 0, %s57
      %s61 = sphi 0, %s60
      %s77 = sphi 0, %s61
      %s83 = sphi 0, %s85
      %s86 = sphi 0, %s83
      %s87 = sphi 0, %s86
      %s103 = sphi 0, %s87
      %s109 = sphi 0, %s111
      %s112 = sphi 0, %s109
      %s113 = sphi 0, %s112
      %s129 = sphi 0, %s113
      %s135 = sphi 0, %s137
      %s138 = sphi 0, %s135
      %s139 = sphi 0, %s138
      %s155 = sphi 0, %s139
      %s161 = sphi 0, %s163
      %s164 = sphi 0, %s161
      %s165 = sphi 0, %s164
      %s181 = sphi 0, %s165
      %s187 = sphi 0, %s189
      %s190 = sphi 0, %s187
      %s191 = sphi 0, %s190
      %s207 = sphi 0, %s191
    $region4: #{tpu_custom_call.1} parent=1 // loop_header_branch
      %29 = sbr.rel (%p27) target = $region8
    $region5: #{tpu_custom_call.1} parent=1 // loop_body
      %s31 = ssub.s32 %s26, 1
      %s32 = ssub.s32 %s26, 2
      %s33 = sadd.s32 %s26, 1
      %s35 = sadd.s32 %s34, 1
      %p38 = scmp.eq.s32.totalorder %s26, 1
      %p39 = scmp.ne.s32.totalorder %s34, %s36
      %p40 = scmp.eq.s32.totalorder %s26, 0
      %p41 = por %p39, %p40
      %p42 = scmp.ne.s32.totalorder %s34, %s36
      %p43 = scmp.eq.s32.totalorder %s31, 1
      %p44 = por %p42, %p43
      %p45 = scmp.ne.s32.totalorder %s36, %s37
      %p46 = scmp.eq.s32.totalorder %s31, 0
      %p47 = por %p45, %p46
      %p48 = scmp.ne.s32.totalorder %s36, %s37
      %p49 = scmp.eq.s32.totalorder %s32, 1
      %p50 = por %p48, %p49
      %p52 = scmp.ne.s32.totalorder %s37, %s51
      %p53 = scmp.eq.s32.totalorder %s32, 0
      %p54 = por %p52, %p53
      %s55 = ssub.s32 %s26, %s33
      %p56 = scmp.eq.s32.totalorder %s55, 0
      %s58 = sadd.s32 %s57, 1
      %s59 = scalar_select %p56, %s57, %s58
      %p62 = pneg %p56
      %p63 = scmp.eq.s32.totalorder %s26, 1
      %p64 = por %p62, %p63
      %p65 = scmp.ne.s32.totalorder %s57, %s60
      %p66 = scmp.eq.s32.totalorder %s26, 0
      %p67 = por %p65, %p66
      %p68 = scmp.ne.s32.totalorder %s57, %s60
      %p69 = scmp.eq.s32.totalorder %s31, 1
      %p70 = por %p68, %p69
      %p71 = scmp.ne.s32.totalorder %s60, %s61
      %p72 = scmp.eq.s32.totalorder %s31, 0
      %p73 = por %p71, %p72
      %p74 = scmp.ne.s32.totalorder %s60, %s61
      %p75 = scmp.eq.s32.totalorder %s32, 1
      %p76 = por %p74, %p75
      %p78 = scmp.ne.s32.totalorder %s61, %s77
      %p79 = scmp.eq.s32.totalorder %s32, 0
      %p80 = por %p78, %p79
      %s81 = ssub.s32 %s26, %s33
      %p82 = scmp.eq.s32.totalorder %s81, 0
      %s84 = sadd.s32 %s83, 1
      %s85 = scalar_select %p82, %s83, %s84
      %p88 = pneg %p82
      %p89 = scmp.eq.s32.totalorder %s26, 1
      %p90 = por %p88, %p89
      %p91 = scmp.ne.s32.totalorder %s83, %s86
      %p92 = scmp.eq.s32.totalorder %s26, 0
      %p93 = por %p91, %p92
      %p94 = scmp.ne.s32.totalorder %s83, %s86
      %p95 = scmp.eq.s32.totalorder %s31, 1
      %p96 = por %p94, %p95
      %p97 = scmp.ne.s32.totalorder %s86, %s87
      %p98 = scmp.eq.s32.totalorder %s31, 0
      %p99 = por %p97, %p98
      %p100 = scmp.ne.s32.totalorder %s86, %s87
      %p101 = scmp.eq.s32.totalorder %s32, 1
      %p102 = por %p100, %p101
      %p104 = scmp.ne.s32.totalorder %s87, %s103
      %p105 = scmp.eq.s32.totalorder %s32, 0
      %p106 = por %p104, %p105
      %s107 = ssub.s32 %s26, %s33
      %p108 = scmp.eq.s32.totalorder %s107, 0
      %s110 = sadd.s32 %s109, 1
      %s111 = scalar_select %p108, %s109, %s110
      %p114 = pneg %p108
      %p115 = scmp.eq.s32.totalorder %s26, 1
      %p116 = por %p114, %p115
      %p117 = scmp.ne.s32.totalorder %s109, %s112
      %p118 = scmp.eq.s32.totalorder %s26, 0
      %p119 = por %p117, %p118
      %p120 = scmp.ne.s32.totalorder %s109, %s112
      %p121 = scmp.eq.s32.totalorder %s31, 1
      %p122 = por %p120, %p121
      %p123 = scmp.ne.s32.totalorder %s112, %s113
      %p124 = scmp.eq.s32.totalorder %s31, 0
      %p125 = por %p123, %p124
      %p126 = scmp.ne.s32.totalorder %s112, %s113
      %p127 = scmp.eq.s32.totalorder %s32, 1
      %p128 = por %p126, %p127
      %p130 = scmp.ne.s32.totalorder %s113, %s129
      %p131 = scmp.eq.s32.totalorder %s32, 0
      %p132 = por %p130, %p131
      %s133 = ssub.s32 %s26, %s33
      %p134 = scmp.eq.s32.totalorder %s133, 0
      %s136 = sadd.s32 %s135, 1
      %s137 = scalar_select %p134, %s135, %s136
      %p140 = pneg %p134
      %p141 = scmp.eq.s32.totalorder %s26, 1
      %p142 = por %p140, %p141
      %p143 = scmp.ne.s32.totalorder %s135, %s138
      %p144 = scmp.eq.s32.totalorder %s26, 0
      %p145 = por %p143, %p144
      %p146 = scmp.ne.s32.totalorder %s135, %s138
      %p147 = scmp.eq.s32.totalorder %s31, 1
      %p148 = por %p146, %p147
      %p149 = scmp.ne.s32.totalorder %s138, %s139
      %p150 = scmp.eq.s32.totalorder %s31, 0
      %p151 = por %p149, %p150
      %p152 = scmp.ne.s32.totalorder %s138, %s139
      %p153 = scmp.eq.s32.totalorder %s32, 1
      %p154 = por %p152, %p153
      %p156 = scmp.ne.s32.totalorder %s139, %s155
      %p157 = scmp.eq.s32.totalorder %s32, 0
      %p158 = por %p156, %p157
      %s159 = ssub.s32 %s26, %s33
      %p160 = scmp.eq.s32.totalorder %s159, 0
      %s162 = sadd.s32 %s161, 1
      %s163 = scalar_select %p160, %s161, %s162
      %p166 = pneg %p160
      %p167 = scmp.eq.s32.totalorder %s26, 1
      %p168 = por %p166, %p167
      %p169 = scmp.ne.s32.totalorder %s161, %s164
      %p170 = scmp.eq.s32.totalorder %s26, 0
      %p171 = por %p169, %p170
      %p172 = scmp.ne.s32.totalorder %s161, %s164
      %p173 = scmp.eq.s32.totalorder %s31, 1
      %p174 = por %p172, %p173
      %p175 = scmp.ne.s32.totalorder %s164, %s165
      %p176 = scmp.eq.s32.totalorder %s31, 0
      %p177 = por %p175, %p176
      %p178 = scmp.ne.s32.totalorder %s164, %s165
      %p179 = scmp.eq.s32.totalorder %s32, 1
      %p180 = por %p178, %p179
      %p182 = scmp.ne.s32.totalorder %s165, %s181
      %p183 = scmp.eq.s32.totalorder %s32, 0
      %p184 = por %p182, %p183
      %s185 = ssub.s32 %s26, %s33
      %p186 = scmp.eq.s32.totalorder %s185, 0
      %s188 = sadd.s32 %s187, 1
      %s189 = scalar_select %p186, %s187, %s188
      %p192 = pneg %p186
      %p193 = scmp.eq.s32.totalorder %s26, 1
      %p194 = por %p192, %p193
      %p195 = scmp.ne.s32.totalorder %s187, %s190
      %p196 = scmp.eq.s32.totalorder %s26, 0
      %p197 = por %p195, %p196
      %p198 = scmp.ne.s32.totalorder %s187, %s190
      %p199 = scmp.eq.s32.totalorder %s31, 1
      %p200 = por %p198, %p199
      %p201 = scmp.ne.s32.totalorder %s190, %s191
      %p202 = scmp.eq.s32.totalorder %s31, 0
      %p203 = por %p201, %p202
      %p204 = scmp.ne.s32.totalorder %s190, %s191
      %p205 = scmp.eq.s32.totalorder %s32, 1
      %p206 = por %p204, %p205
      %p208 = scmp.ne.s32.totalorder %s191, %s207
      %p209 = scmp.eq.s32.totalorder %s32, 0
      %p210 = por %p208, %p209
      %p211 = scmp.le.s32.totalorder 1, %s26
      %p212 = scmp.lt.s32.totalorder %s26, 3
      %p213 = pnand %p211, %p212
      %p214 = pneg %p213
      // Predicated region
      $region9: #{tpu_custom_call.1} parent=5 // pred_check
        _
      $region10: #{tpu_custom_call.1} parent=5 // pred_check_branch
        %216 = sbr.rel (%p213) target = $region12
      $region11: #{tpu_custom_call.1} parent=5 // pred_region
        %s217 = ssub.s32 %s26, 1
        // Predicated region
        $region13: #{tpu_custom_call.1} parent=11 // pred_check
          %p218 = pneg %p47
        $region14: #{tpu_custom_call.1} parent=11 // pred_check_branch
          %220 = sbr.rel (%p218) target = $region16
        $region15: #{tpu_custom_call.1} parent=11 // pred_region
          %s222 = ssub.s32 1024, 1024
          %223 = vsyncadd [#allocation4], %s222
          %s224 = sshll.u32 [#allocation3], 4
          %s225 = int_to_ptr.vmem [resolvable:$true] %s224
          %230 = dma.hbm_to_vmem [thread:$0]  %s0, 1024, %s225, [#allocation4], 128, 128, 8
        $region16: #{tpu_custom_call.1} parent=11 // pred_fallthru
          _
      $region12: #{tpu_custom_call.1} parent=5 // pred_fallthru
        _
      %p231 = scmp.lt.s32.totalorder %s26, 2
      // Predicated region
      $region17: #{tpu_custom_call.1} parent=5 // pred_check
        %p232 = pneg %p231
      $region18: #{tpu_custom_call.1} parent=5 // pred_check_branch
        %234 = sbr.rel (%p232) target = $region20
      $region19: #{tpu_custom_call.1} parent=5 // pred_region
        // Predicated region
        $region21: #{tpu_custom_call.1} parent=19 // pred_check
          %p235 = pneg %p67
        $region22: #{tpu_custom_call.1} parent=19 // pred_check_branch
          %237 = sbr.rel (%p235) target = $region24
        $region23: #{tpu_custom_call.1} parent=19 // pred_region
          %s238 = sand.u32 %s26, 1
          %s239 = scalar_lea.sflag [#allocation7], %s238
          %s240 = sand.u32 %s57, 1
          %s241 = smul.addr %s240, 128
          %s242 = scalar_lea.vmem [#allocation6], %s241
          %s244 = ssub.s32 2048, 2048
          %245 = vsyncadd %s239, %s244
          %s246 = smul.addr %s26, 32
          %s247 = smul.addr %s246, 64
          %s248 = scalar_lea.hbm %s1, %s247
          %s249 = sshll.u32 %s242, 4
          %s250 = int_to_ptr.vmem [resolvable:$true] %s249
          %255 = dma.hbm_to_vmem [thread:$0]  %s248, 2048, %s250, %s239, 256, 256, 16
        $region24: #{tpu_custom_call.1} parent=19 // pred_fallthru
          _
        // Predicated region
        $region25: #{tpu_custom_call.1} parent=19 // pred_check
          %p256 = pneg %p93
        $region26: #{tpu_custom_call.1} parent=19 // pred_check_branch
          %258 = sbr.rel (%p256) target = $region28
        $region27: #{tpu_custom_call.1} parent=19 // pred_region
          %s259 = sand.u32 %s26, 1
          %s260 = scalar_lea.sflag [#allocation7], %s259
          %s261 = sand.u32 %s83, 1
          %s262 = smul.addr %s261, 4
          %s263 = scalar_lea.vmem [#allocation8], %s262
          %s265 = ssub.s32 64, 64
          %266 = vsyncadd %s260, %s265
          %s267 = smul.addr %s26, 4
          %s268 = smul.addr %s267, 16
          %s269 = scalar_lea.hbm %s2, %s268
          %s271 = sshll.u32 %s263, 4
          %s272 = int_to_ptr.vmem [resolvable:$true] %s271
          %274 = dma.hbm_to_vmem [thread:$0]  %s269, 64, %s272, %s260
        $region28: #{tpu_custom_call.1} parent=19 // pred_fallthru
          _
        // Predicated region
        $region29: #{tpu_custom_call.1} parent=19 // pred_check
          %p275 = pneg %p119
        $region30: #{tpu_custom_call.1} parent=19 // pred_check_branch
          %277 = sbr.rel (%p275) target = $region32
        $region31: #{tpu_custom_call.1} parent=19 // pred_region
          %s278 = sand.u32 %s109, 1
          %s279 = scalar_lea.sflag [#allocation10], %s278
          %s280 = sand.u32 %s109, 1
          %s281 = smul.addr %s280, 256
          %s282 = scalar_lea.vmem [#allocation9], %s281
          %s284 = ssub.s32 4096, 4096
          %285 = vsyncadd %s279, %s284
          %s286 = smul.addr %s26, 64
          %s287 = smul.addr %s286, 64
          %s288 = scalar_lea.hbm %s3, %s287
          %s289 = sshll.u32 %s282, 4
          %s290 = int_to_ptr.vmem [resolvable:$true] %s289
          %295 = dma.hbm_to_vmem [thread:$0]  %s288, 4096, %s290, %s279, 256, 256, 16
        $region32: #{tpu_custom_call.1} parent=19 // pred_fallthru
          _
      $region20: #{tpu_custom_call.1} parent=5 // pred_fallthru
        _
      %p296 = scmp.le.s32.totalorder 1, %s26
      %p297 = scmp.lt.s32.totalorder %s26, 3
      %p298 = pnand %p296, %p297
      %p299 = pneg %p298
      // Predicated region
      $region33: #{tpu_custom_call.1} parent=5 // pred_check
        _
      $region34: #{tpu_custom_call.1} parent=5 // pred_check_branch
        %301 = sbr.rel (%p298) target = $region36
      $region35: #{tpu_custom_call.1} parent=5 // pred_region
        %s302 = ssub.s32 %s26, 1
        // Predicated region
        $region37: #{tpu_custom_call.1} parent=35 // pred_check
          %p303 = pneg %p47
        $region38: #{tpu_custom_call.1} parent=35 // pred_check_branch
          %305 = sbr.rel (%p303) target = $region40
        $region39: #{tpu_custom_call.1} parent=35 // pred_region
          %306 = dma.done [#allocation4], 1024
        $region40: #{tpu_custom_call.1} parent=35 // pred_fallthru
          _
        %s307 = sand.u32 %s31, 1
        %s308 = scalar_lea.sflag [#allocation7], %s307
        %s309 = sand.u32 %s60, 1
        %s310 = smul.addr %s309, 128
        %s311 = scalar_lea.vmem [#allocation6], %s310
        // Predicated region
        $region41: #{tpu_custom_call.1} parent=35 // pred_check
          %p312 = pneg %p73
        $region42: #{tpu_custom_call.1} parent=35 // pred_check_branch
          %314 = sbr.rel (%p312) target = $region44
        $region43: #{tpu_custom_call.1} parent=35 // pred_region
          %315 = dma.done %s308, 2048
        $region44: #{tpu_custom_call.1} parent=35 // pred_fallthru
          _
        %s316 = sand.u32 %s31, 1
        %s317 = scalar_lea.sflag [#allocation7], %s316
        %s318 = sand.u32 %s86, 1
        %s319 = smul.addr %s318, 4
        %s320 = scalar_lea.vmem [#allocation8], %s319
        // Predicated region
        $region45: #{tpu_custom_call.1} parent=35 // pred_check
          %p321 = pneg %p99
        $region46: #{tpu_custom_call.1} parent=35 // pred_check_branch
          %323 = sbr.rel (%p321) target = $region48
        $region47: #{tpu_custom_call.1} parent=35 // pred_region
          %324 = dma.done %s317, 64
        $region48: #{tpu_custom_call.1} parent=35 // pred_fallthru
          _
        %s325 = sand.u32 %s112, 1
        %s326 = scalar_lea.sflag [#allocation10], %s325
        %s327 = sand.u32 %s112, 1
        %s328 = smul.addr %s327, 256
        %s329 = scalar_lea.vmem [#allocation9], %s328
        // Predicated region
        $region49: #{tpu_custom_call.1} parent=35 // pred_check
          %p330 = pneg %p125
        $region50: #{tpu_custom_call.1} parent=35 // pred_check_branch
          %332 = sbr.rel (%p330) target = $region52
        $region51: #{tpu_custom_call.1} parent=35 // pred_region
          %333 = dma.done %s326, 4096
        $region52: #{tpu_custom_call.1} parent=35 // pred_fallthru
          _
        %p334 = pneg %p47
        %p335 = pneg %p44
        %s336 = sand.u32 %s31, 1
        %s337 = scalar_lea.sflag [#allocation7], %s336
        %s338 = sand.u32 %s60, 1
        %s339 = smul.addr %s338, 128
        %s340 = scalar_lea.vmem [#allocation6], %s339
        %p341 = pneg %p73
        %p342 = pneg %p70
        %s343 = sand.u32 %s31, 1
        %s344 = scalar_lea.sflag [#allocation7], %s343
        %s345 = sand.u32 %s86, 1
        %s346 = smul.addr %s345, 4
        %s347 = scalar_lea.vmem [#allocation8], %s346
        %p348 = pneg %p99
        %p349 = pneg %p96
        %s350 = sand.u32 %s112, 1
        %s351 = scalar_lea.sflag [#allocation10], %s350
        %s352 = sand.u32 %s112, 1
        %s353 = smul.addr %s352, 256
        %s354 = scalar_lea.vmem [#allocation9], %s353
        %p355 = pneg %p125
        %p356 = pneg %p122
        %p357 = pneg %p151
        %p358 = pneg %p148
        %s359 = sand.u32 %s138, 1
        %s360 = scalar_lea.sflag [#allocation5], %s359
        %s361 = sand.u32 %s138, 1
        %s362 = smul.addr %s361, 64
        %s363 = scalar_lea.vmem [#allocation11], %s362
        %p364 = pneg %p177
        %p365 = pneg %p174
        %s366 = sand.u32 %s31, 1
        %s367 = scalar_lea.sflag [#allocation13], %s366
        %s368 = sand.u32 %s164, 1
        %s369 = smul.addr %s368, 8
        %s370 = scalar_lea.vmem [#allocation12], %s369
        %p371 = pneg %p203
        %p372 = pneg %p200
        %s373 = sand.u32 %s31, 1
        %s374 = scalar_lea.sflag [#allocation13], %s373
        %s375 = sand.u32 %s190, 1
        %s376 = smul.addr %s375, 8
        %s377 = scalar_lea.vmem [#allocation14], %s376
        %v379 = vld [vmem:[#allocation3] sm:$0xff]
        %v380 = vld [vmem:[#allocation3 + $0x8] sm:$0xff]
        %v381 = vld [vmem:[#allocation3 + $0x10] sm:$0xff]
        %v382 = vld [vmem:[#allocation3 + $0x18] sm:$0xff]
        %v383 = vld [vmem:[#allocation3 + $0x20] sm:$0xff]
        %v384 = vld [vmem:[#allocation3 + $0x28] sm:$0xff]
        %v385 = vld [vmem:[#allocation3 + $0x30] sm:$0xff]
        %v386 = vld [vmem:[#allocation3 + $0x38] sm:$0xff]
        %v387 = vpack.c.bf16 %v380, %v379
        %v388 = vpack.c.bf16 %v382, %v381
        %v389 = vpack.c.bf16 %v384, %v383
        %v390 = vpack.c.bf16 %v386, %v385
        %v391 = vld [vmem:[%s311] sm:$0xff]
        %v392 = vld [vmem:[%s311 + $0x8] sm:$0xff]
        %v393 = vld [vmem:[%s311 + $0x10] sm:$0xff]
        %v394 = vld [vmem:[%s311 + $0x18] sm:$0xff]
        %v395 = vld [vmem:[%s311 + $0x20] sm:$0xff]
        %v396 = vld [vmem:[%s311 + $0x28] sm:$0xff]
        %v397 = vld [vmem:[%s311 + $0x30] sm:$0xff]
        %v398 = vld [vmem:[%s311 + $0x38] sm:$0xff]
        %v399 = vld [vmem:[%s311 + $0x40] sm:$0xff]
        %v400 = vld [vmem:[%s311 + $0x48] sm:$0xff]
        %v401 = vld [vmem:[%s311 + $0x50] sm:$0xff]
        %v402 = vld [vmem:[%s311 + $0x58] sm:$0xff]
        %v403 = vld [vmem:[%s311 + $0x60] sm:$0xff]
        %v404 = vld [vmem:[%s311 + $0x68] sm:$0xff]
        %v405 = vld [vmem:[%s311 + $0x70] sm:$0xff]
        %v406 = vld [vmem:[%s311 + $0x78] sm:$0xff]
        %v407 = vld [vmem:[%s320] sm:$0xf]
        %v409 = vlaneseq
        %v410 = vshrl.u32 %v409, 7
        %v411 = vsub.s32 0, %v410
        %v412 = vrot.slane %v407, %v411
        %v413 = vlaneseq
        %v414 = vshrl.u32 %v413, 7
        %v415 = vsub.s32 1, %v414
        %v416 = vrot.slane %v407, %v415
        %v417 = vlaneseq
        %v418 = vshrl.u32 %v417, 7
        %v419 = vsub.s32 2, %v418
        %v420 = vrot.slane %v407, %v419
        %v421 = vlaneseq
        %v422 = vshrl.u32 %v421, 7
        %v423 = vsub.s32 3, %v422
        %v424 = vrot.slane %v407, %v423
        %v445 = vunpack.c.l.b16 %v391
        %v446 = vunpack.c.h.b16 %v391
        %v447 = vunpack.c.l.b16 %v392
        %v448 = vunpack.c.h.b16 %v392
        %v449 = vunpack.c.l.b16 %v393
        %v450 = vunpack.c.h.b16 %v393
        %v451 = vunpack.c.l.b16 %v394
        %v452 = vunpack.c.h.b16 %v394
        %v453 = vunpack.c.l.b16 %v395
        %v454 = vunpack.c.h.b16 %v395
        %v455 = vunpack.c.l.b16 %v396
        %v456 = vunpack.c.h.b16 %v396
        %v457 = vunpack.c.l.b16 %v397
        %v458 = vunpack.c.h.b16 %v397
        %v459 = vunpack.c.l.b16 %v398
        %v460 = vunpack.c.h.b16 %v398
        %v461 = vunpack.c.l.b16 %v399
        %v462 = vunpack.c.h.b16 %v399
        %v463 = vunpack.c.l.b16 %v400
        %v464 = vunpack.c.h.b16 %v400
        %v465 = vunpack.c.l.b16 %v401
        %v466 = vunpack.c.h.b16 %v401
        %v467 = vunpack.c.l.b16 %v402
        %v468 = vunpack.c.h.b16 %v402
        %v469 = vunpack.c.l.b16 %v403
        %v470 = vunpack.c.h.b16 %v403
        %v471 = vunpack.c.l.b16 %v404
        %v472 = vunpack.c.h.b16 %v404
        %v473 = vunpack.c.l.b16 %v405
        %v474 = vunpack.c.h.b16 %v405
        %v475 = vunpack.c.l.b16 %v406
        %v476 = vunpack.c.h.b16 %v406
        %v477 = vpack.c.b16 %v449, %v445
        %v478 = vpack.c.b16 %v450, %v446
        %v479 = vpack.c.b16 %v451, %v447
        %v480 = vpack.c.b16 %v452, %v448
        %v481 = vpack.c.b16 %v457, %v453
        %v482 = vpack.c.b16 %v458, %v454
        %v483 = vpack.c.b16 %v459, %v455
        %v484 = vpack.c.b16 %v460, %v456
        %v485 = vpack.c.b16 %v465, %v461
        %v486 = vpack.c.b16 %v466, %v462
        %v487 = vpack.c.b16 %v467, %v463
        %v488 = vpack.c.b16 %v468, %v464
        %v489 = vpack.c.b16 %v473, %v469
        %v490 = vpack.c.b16 %v474, %v470
        %v491 = vpack.c.b16 %v475, %v471
        %v492 = vpack.c.b16 %v476, %v472
        %vm509 = vcmask 523264
        %v511 = vsel %vm509, %v387, 0
        %v514 = vsel %vm509, %v388, 0
        %v517 = vsel %vm509, %v389, 0
        %v520 = vsel %vm509, %v390, 0
        %522 = vmatprep.subr.bf16.mxu0 0
        %523 = vmatpush1.bf16.msra.mxu0 0
        %524 = vmatprep.subr.bf16.mxu0 0
        %525 = vmatpush1.bf16.msra.mxu0 0
        %526 = vmatprep.subr.bf16.mxu0 0
        %527 = vmatpush1.bf16.msra.mxu0 0
        %528 = vmatprep.subr.bf16.mxu0 0
        %529 = vmatpush1.bf16.msra.mxu0 0
        %530 = vmatprep.subr.bf16.mxu0 %v490
        %531 = vmatpush1.bf16.msra.mxu0 %v489
        %532 = vmatprep.subr.bf16.mxu0 %v486
        %533 = vmatpush1.bf16.msra.mxu0 %v485
        %534 = vmatprep.subr.bf16.mxu0 %v482
        %535 = vmatpush1.bf16.msra.mxu0 %v481
        %536 = vmatprep.subr.bf16.mxu0 %v478
        %537 = vmatpush1.bf16.msra.mxu0 %v477
        %538 = vmatprep.subr.bf16.mxu0 0
        %539 = vmatpush2.bf16.msra.mxu0 0
        %540 = vmatprep.subr.bf16.mxu0 0
        %541 = vmatpush2.bf16.msra.mxu0 0
        %542 = vmatprep.subr.bf16.mxu0 0
        %543 = vmatpush2.bf16.msra.mxu0 0
        %544 = vmatprep.subr.bf16.mxu0 0
        %545 = vmatpush2.bf16.msra.mxu0 0
        %546 = vmatprep.subr.bf16.mxu0 0
        %547 = vmatpush2.bf16.msra.mxu0 0
        %548 = vmatprep.subr.bf16.mxu0 0
        %549 = vmatpush2.bf16.msra.mxu0 0
        %550 = vmatprep.subr.bf16.mxu0 0
        %551 = vmatpush2.bf16.msra.mxu0 0
        %552 = vmatprep.subr.bf16.mxu0 0
        %553 = vmatpush2.bf16.msra.mxu0 0
        %554 = vmatprep.mubr.bf16.mxu0 0
        %555 = vmatmul.mubr.bf16.gmra.mxu0 %v511
        %v556 = vpop.f32.mrf.mxu0
        %v557 = vadd.f32 %v412, %v556
        %v558 = vpop.f32.mrf.mxu0
        %v559 = vadd.f32 %v416, %v558
        %v560 = vpop.f32.mrf.mxu0
        %v561 = vadd.f32 %v412, %v560
        %v562 = vpop.f32.mrf.mxu0
        %v563 = vadd.f32 %v416, %v562
        %564 = vmatprep.mubr.bf16.mxu0 0
        %565 = vmatmul.mubr.bf16.gmra.mxu0 %v514
        %v566 = vpop.f32.mrf.mxu0
        %v567 = vadd.f32 %v412, %v566
        %v568 = vpop.f32.mrf.mxu0
        %v569 = vadd.f32 %v416, %v568
        %v570 = vpop.f32.mrf.mxu0
        %v571 = vadd.f32 %v412, %v570
        %v572 = vpop.f32.mrf.mxu0
        %v573 = vadd.f32 %v416, %v572
        %574 = vmatprep.mubr.bf16.mxu0 0
        %575 = vmatmul.mubr.bf16.gmra.mxu0 %v517
        %v576 = vpop.f32.mrf.mxu0
        %v577 = vadd.f32 %v412, %v576
        %v578 = vpop.f32.mrf.mxu0
        %v579 = vadd.f32 %v416, %v578
        %v580 = vpop.f32.mrf.mxu0
        %v581 = vadd.f32 %v412, %v580
        %v582 = vpop.f32.mrf.mxu0
        %v583 = vadd.f32 %v416, %v582
        %584 = vmatprep.mubr.bf16.mxu0 0
        %585 = vmatmul.mubr.bf16.gmra.mxu0 %v520
        %v586 = vpop.f32.mrf.mxu0
        %v587 = vadd.f32 %v412, %v586
        %v588 = vpop.f32.mrf.mxu0
        %v589 = vadd.f32 %v416, %v588
        %v590 = vpop.f32.mrf.mxu0
        %v591 = vadd.f32 %v412, %v590
        %v592 = vpop.f32.mrf.mxu0
        %v593 = vadd.f32 %v416, %v592
        %594 = vdwg.mxu0
        %595 = vmatprep.subr.bf16.mxu0 0
        %596 = vmatpush1.bf16.msra.mxu0 0
        %597 = vmatprep.subr.bf16.mxu0 0
        %598 = vmatpush1.bf16.msra.mxu0 0
        %599 = vmatprep.subr.bf16.mxu0 0
        %600 = vmatpush1.bf16.msra.mxu0 0
        %601 = vmatprep.subr.bf16.mxu0 0
        %602 = vmatpush1.bf16.msra.mxu0 0
        %603 = vmatprep.subr.bf16.mxu0 %v492
        %604 = vmatpush1.bf16.msra.mxu0 %v491
        %605 = vmatprep.subr.bf16.mxu0 %v488
        %606 = vmatpush1.bf16.msra.mxu0 %v487
        %607 = vmatprep.subr.bf16.mxu0 %v484
        %608 = vmatpush1.bf16.msra.mxu0 %v483
        %609 = vmatprep.subr.bf16.mxu0 %v480
        %610 = vmatpush1.bf16.msra.mxu0 %v479
        %611 = vmatprep.subr.bf16.mxu0 0
        %612 = vmatpush2.bf16.msra.mxu0 0
        %613 = vmatprep.subr.bf16.mxu0 0
        %614 = vmatpush2.bf16.msra.mxu0 0
        %615 = vmatprep.subr.bf16.mxu0 0
        %616 = vmatpush2.bf16.msra.mxu0 0
        %617 = vmatprep.subr.bf16.mxu0 0
        %618 = vmatpush2.bf16.msra.mxu0 0
        %619 = vmatprep.subr.bf16.mxu0 0
        %620 = vmatpush2.bf16.msra.mxu0 0
        %621 = vmatprep.subr.bf16.mxu0 0
        %622 = vmatpush2.bf16.msra.mxu0 0
        %623 = vmatprep.subr.bf16.mxu0 0
        %624 = vmatpush2.bf16.msra.mxu0 0
        %625 = vmatprep.subr.bf16.mxu0 0
        %626 = vmatpush2.bf16.msra.mxu0 0
        %627 = vmatprep.mubr.bf16.mxu0 0
        %628 = vmatmul.mubr.bf16.gmra.mxu0 %v511
        %v629 = vpop.f32.mrf.mxu0
        %v630 = vadd.f32 %v420, %v629
        %v631 = vpop.f32.mrf.mxu0
        %v632 = vadd.f32 %v424, %v631
        %v633 = vpop.f32.mrf.mxu0
        %v634 = vadd.f32 %v420, %v633
        %v635 = vpop.f32.mrf.mxu0
        %v636 = vadd.f32 %v424, %v635
        %637 = vmatprep.mubr.bf16.mxu0 0
        %638 = vmatmul.mubr.bf16.gmra.mxu0 %v514
        %v639 = vpop.f32.mrf.mxu0
        %v640 = vadd.f32 %v420, %v639
        %v641 = vpop.f32.mrf.mxu0
        %v642 = vadd.f32 %v424, %v641
        %v643 = vpop.f32.mrf.mxu0
        %v644 = vadd.f32 %v420, %v643
        %v645 = vpop.f32.mrf.mxu0
        %v646 = vadd.f32 %v424, %v645
        %647 = vmatprep.mubr.bf16.mxu0 0
        %648 = vmatmul.mubr.bf16.gmra.mxu0 %v517
        %v649 = vpop.f32.mrf.mxu0
        %v650 = vadd.f32 %v420, %v649
        %v651 = vpop.f32.mrf.mxu0
        %v652 = vadd.f32 %v424, %v651
        %v653 = vpop.f32.mrf.mxu0
        %v654 = vadd.f32 %v420, %v653
        %v655 = vpop.f32.mrf.mxu0
        %v656 = vadd.f32 %v424, %v655
        %657 = vmatprep.mubr.bf16.mxu0 0
        %658 = vmatmul.mubr.bf16.gmra.mxu0 %v520
        %v659 = vpop.f32.mrf.mxu0
        %v660 = vadd.f32 %v420, %v659
        %v661 = vpop.f32.mrf.mxu0
        %v662 = vadd.f32 %v424, %v661
        %v663 = vpop.f32.mrf.mxu0
        %v664 = vadd.f32 %v420, %v663
        %v665 = vpop.f32.mrf.mxu0
        %v666 = vadd.f32 %v424, %v665
        %667 = vdwg.mxu0
        %668 = vst [vmem:[#allocation2] sm:$0xff] %v557
        %669 = vst [vmem:[#allocation2 + $0x8] sm:$0xff] %v559
        %670 = vst [vmem:[#allocation2 + $0x10] sm:$0xff] %v630
        %671 = vst [vmem:[#allocation2 + $0x18] sm:$0xff] %v632
        %672 = vst [vmem:[#allocation2 + $0x20] sm:$0xff] %v561
        %673 = vst [vmem:[#allocation2 + $0x28] sm:$0xff] %v563
        %674 = vst [vmem:[#allocation2 + $0x30] sm:$0xff] %v634
        %675 = vst [vmem:[#allocation2 + $0x38] sm:$0xff] %v636
        %676 = vst [vmem:[#allocation2 + $0x40] sm:$0xff] %v567
        %677 = vst [vmem:[#allocation2 + $0x48] sm:$0xff] %v569
        %678 = vst [vmem:[#allocation2 + $0x50] sm:$0xff] %v640
        %679 = vst [vmem:[#allocation2 + $0x58] sm:$0xff] %v642
        %680 = vst [vmem:[#allocation2 + $0x60] sm:$0xff] %v571
        %681 = vst [vmem:[#allocation2 + $0x68] sm:$0xff] %v573
        %682 = vst [vmem:[#allocation2 + $0x70] sm:$0xff] %v644
        %683 = vst [vmem:[#allocation2 + $0x78] sm:$0xff] %v646
        %684 = vst [vmem:[#allocation2 + $0x80] sm:$0xff] %v577
        %685 = vst [vmem:[#allocation2 + $0x88] sm:$0xff] %v579
        %686 = vst [vmem:[#allocation2 + $0x90] sm:$0xff] %v650
        %687 = vst [vmem:[#allocation2 + $0x98] sm:$0xff] %v652
        %688 = vst [vmem:[#allocation2 + $0xa0] sm:$0xff] %v581
        %689 = vst [vmem:[#allocation2 + $0xa8] sm:$0xff] %v583
        %690 = vst [vmem:[#allocation2 + $0xb0] sm:$0xff] %v654
        %691 = vst [vmem:[#allocation2 + $0xb8] sm:$0xff] %v656
        %692 = vst [vmem:[#allocation2 + $0xc0] sm:$0xff] %v587
        %693 = vst [vmem:[#allocation2 + $0xc8] sm:$0xff] %v589
        %694 = vst [vmem:[#allocation2 + $0xd0] sm:$0xff] %v660
        %695 = vst [vmem:[#allocation2 + $0xd8] sm:$0xff] %v662
        %696 = vst [vmem:[#allocation2 + $0xe0] sm:$0xff] %v591
        %697 = vst [vmem:[#allocation2 + $0xe8] sm:$0xff] %v593
        %698 = vst [vmem:[#allocation2 + $0xf0] sm:$0xff] %v664
        %699 = vst [vmem:[#allocation2 + $0xf8] sm:$0xff] %v666
        %v700 = vld [vmem:[%s329] sm:$0xff]
        %v701 = vld [vmem:[%s329 + $0x8] sm:$0xff]
        %v702 = vld [vmem:[%s329 + $0x10] sm:$0xff]
        %v703 = vld [vmem:[%s329 + $0x18] sm:$0xff]
        %v704 = vld [vmem:[%s329 + $0x20] sm:$0xff]
        %v705 = vld [vmem:[%s329 + $0x28] sm:$0xff]
        %v706 = vld [vmem:[%s329 + $0x30] sm:$0xff]
        %v707 = vld [vmem:[%s329 + $0x38] sm:$0xff]
        %v708 = vld [vmem:[%s329 + $0x40] sm:$0xff]
        %v709 = vld [vmem:[%s329 + $0x48] sm:$0xff]
        %v710 = vld [vmem:[%s329 + $0x50] sm:$0xff]
        %v711 = vld [vmem:[%s329 + $0x58] sm:$0xff]
        %v712 = vld [vmem:[%s329 + $0x60] sm:$0xff]
        %v713 = vld [vmem:[%s329 + $0x68] sm:$0xff]
        %v714 = vld [vmem:[%s329 + $0x70] sm:$0xff]
        %v715 = vld [vmem:[%s329 + $0x78] sm:$0xff]
        %v716 = vld [vmem:[%s329 + $0x80] sm:$0xff]
        %v717 = vld [vmem:[%s329 + $0x88] sm:$0xff]
        %v718 = vld [vmem:[%s329 + $0x90] sm:$0xff]
        %v719 = vld [vmem:[%s329 + $0x98] sm:$0xff]
        %v720 = vld [vmem:[%s329 + $0xa0] sm:$0xff]
        %v721 = vld [vmem:[%s329 + $0xa8] sm:$0xff]
        %v722 = vld [vmem:[%s329 + $0xb0] sm:$0xff]
        %v723 = vld [vmem:[%s329 + $0xb8] sm:$0xff]
        %v724 = vld [vmem:[%s329 + $0xc0] sm:$0xff]
        %v725 = vld [vmem:[%s329 + $0xc8] sm:$0xff]
        %v726 = vld [vmem:[%s329 + $0xd0] sm:$0xff]
        %v727 = vld [vmem:[%s329 + $0xd8] sm:$0xff]
        %v728 = vld [vmem:[%s329 + $0xe0] sm:$0xff]
        %v729 = vld [vmem:[%s329 + $0xe8] sm:$0xff]
        %v730 = vld [vmem:[%s329 + $0xf0] sm:$0xff]
        %v731 = vld [vmem:[%s329 + $0xf8] sm:$0xff]
        loop: start=0, step=1, limit=8
        $region53: #{tpu_custom_call.1} parent=35 // loop_pre_header
          _
        $region54: #{tpu_custom_call.1} parent=35 // loop_header
          %s733 = sphi 0, %s737
          %p734 = scmp.ge.s32.totalorder %s733, 8
          %v738 = vphi 0.0, %v1024
          %v739 = vphi 0.0, %v1022
        $region55: #{tpu_custom_call.1} parent=35 // loop_header_branch
          %736 = sbr.rel (%p734) target = $region59
        $region56: #{tpu_custom_call.1} parent=35 // loop_body
          %s740 = smul.u32 %s733, 2
          %s741 = ssub.s32 7, %s740
          %s742 = smul.u32 %s31, %s741
          %s743 = sadd.s32 %s733, %s742
          %s744 = smul.u32 %s743, 8
          %s745 = sshra.s32 %s744, 3
          %s746 = sand.u32 %s744, 7
          %s747 = smul.u32 %s745, 4
          %s748 = smul.addr %s747, 8
          %s749 = scalar_lea.vmem [#allocation2], %s748
          %v750 = vld [vmem:[%s749] sm:$0xff]
          %v751 = vld [vmem:[%s749 + $0x8] sm:$0xff]
          %v752 = vld [vmem:[%s749 + $0x10] sm:$0xff]
          %v753 = vld [vmem:[%s749 + $0x18] sm:$0xff]
          %v754 = vpack.c.bf16 %v738, %v738
          %v787 = vunpack.c.l.b16 %v700
          %v788 = vunpack.c.h.b16 %v700
          %v789 = vunpack.c.l.b16 %v701
          %v790 = vunpack.c.h.b16 %v701
          %v791 = vunpack.c.l.b16 %v702
          %v792 = vunpack.c.h.b16 %v702
          %v793 = vunpack.c.l.b16 %v703
          %v794 = vunpack.c.h.b16 %v703
          %v795 = vunpack.c.l.b16 %v704
          %v796 = vunpack.c.h.b16 %v704
          %v797 = vunpack.c.l.b16 %v705
          %v798 = vunpack.c.h.b16 %v705
          %v799 = vunpack.c.l.b16 %v706
          %v800 = vunpack.c.h.b16 %v706
          %v801 = vunpack.c.l.b16 %v707
          %v802 = vunpack.c.h.b16 %v707
          %v803 = vunpack.c.l.b16 %v708
          %v804 = vunpack.c.h.b16 %v708
          %v805 = vunpack.c.l.b16 %v709
          %v806 = vunpack.c.h.b16 %v709
          %v807 = vunpack.c.l.b16 %v710
          %v808 = vunpack.c.h.b16 %v710
          %v809 = vunpack.c.l.b16 %v711
          %v810 = vunpack.c.h.b16 %v711
          %v811 = vunpack.c.l.b16 %v712
          %v812 = vunpack.c.h.b16 %v712
          %v813 = vunpack.c.l.b16 %v713
          %v814 = vunpack.c.h.b16 %v713
          %v815 = vunpack.c.l.b16 %v714
          %v816 = vunpack.c.h.b16 %v714
          %v817 = vunpack.c.l.b16 %v715
          %v818 = vunpack.c.h.b16 %v715
          %v819 = vunpack.c.l.b16 %v716
          %v820 = vunpack.c.h.b16 %v716
          %v821 = vunpack.c.l.b16 %v717
          %v822 = vunpack.c.h.b16 %v717
          %v823 = vunpack.c.l.b16 %v718
          %v824 = vunpack.c.h.b16 %v718
          %v825 = vunpack.c.l.b16 %v719
          %v826 = vunpack.c.h.b16 %v719
          %v827 = vunpack.c.l.b16 %v720
          %v828 = vunpack.c.h.b16 %v720
          %v829 = vunpack.c.l.b16 %v721
          %v830 = vunpack.c.h.b16 %v721
          %v831 = vunpack.c.l.b16 %v722
          %v832 = vunpack.c.h.b16 %v722
          %v833 = vunpack.c.l.b16 %v723
          %v834 = vunpack.c.h.b16 %v723
          %v835 = vunpack.c.l.b16 %v724
          %v836 = vunpack.c.h.b16 %v724
          %v837 = vunpack.c.l.b16 %v725
          %v838 = vunpack.c.h.b16 %v725
          %v839 = vunpack.c.l.b16 %v726
          %v840 = vunpack.c.h.b16 %v726
          %v841 = vunpack.c.l.b16 %v727
          %v842 = vunpack.c.h.b16 %v727
          %v843 = vunpack.c.l.b16 %v728
          %v844 = vunpack.c.h.b16 %v728
          %v845 = vunpack.c.l.b16 %v729
          %v846 = vunpack.c.h.b16 %v729
          %v847 = vunpack.c.l.b16 %v730
          %v848 = vunpack.c.h.b16 %v730
          %v849 = vunpack.c.l.b16 %v731
          %v850 = vunpack.c.h.b16 %v731
          %v851 = vpack.c.b16 %v791, %v787
          %v852 = vpack.c.b16 %v792, %v788
          %v853 = vpack.c.b16 %v793, %v789
          %v854 = vpack.c.b16 %v794, %v790
          %v855 = vpack.c.b16 %v799, %v795
          %v856 = vpack.c.b16 %v800, %v796
          %v857 = vpack.c.b16 %v801, %v797
          %v858 = vpack.c.b16 %v802, %v798
          %v859 = vpack.c.b16 %v807, %v803
          %v860 = vpack.c.b16 %v808, %v804
          %v861 = vpack.c.b16 %v809, %v805
          %v862 = vpack.c.b16 %v810, %v806
          %v863 = vpack.c.b16 %v815, %v811
          %v864 = vpack.c.b16 %v816, %v812
          %v865 = vpack.c.b16 %v817, %v813
          %v866 = vpack.c.b16 %v818, %v814
          %v867 = vpack.c.b16 %v823, %v819
          %v868 = vpack.c.b16 %v824, %v820
          %v869 = vpack.c.b16 %v825, %v821
          %v870 = vpack.c.b16 %v826, %v822
          %v871 = vpack.c.b16 %v831, %v827
          %v872 = vpack.c.b16 %v832, %v828
          %v873 = vpack.c.b16 %v833, %v829
          %v874 = vpack.c.b16 %v834, %v830
          %v875 = vpack.c.b16 %v839, %v835
          %v876 = vpack.c.b16 %v840, %v836
          %v877 = vpack.c.b16 %v841, %v837
          %v878 = vpack.c.b16 %v842, %v838
          %v879 = vpack.c.b16 %v847, %v843
          %v880 = vpack.c.b16 %v848, %v844
          %v881 = vpack.c.b16 %v849, %v845
          %v882 = vpack.c.b16 %v850, %v846
          %915 = vmatprep.subr.bf16.mxu0 %v880
          %916 = vmatpush1.bf16.msra.mxu0 %v879
          %917 = vmatprep.subr.bf16.mxu0 %v876
          %918 = vmatpush1.bf16.msra.mxu0 %v875
          %919 = vmatprep.subr.bf16.mxu0 %v872
          %920 = vmatpush1.bf16.msra.mxu0 %v871
          %921 = vmatprep.subr.bf16.mxu0 %v868
          %922 = vmatpush1.bf16.msra.mxu0 %v867
          %923 = vmatprep.subr.bf16.mxu0 %v864
          %924 = vmatpush1.bf16.msra.mxu0 %v863
          %925 = vmatprep.subr.bf16.mxu0 %v860
          %926 = vmatpush1.bf16.msra.mxu0 %v859
          %927 = vmatprep.subr.bf16.mxu0 %v856
          %928 = vmatpush1.bf16.msra.mxu0 %v855
          %929 = vmatprep.subr.bf16.mxu0 %v852
          %930 = vmatpush1.bf16.msra.mxu0 %v851
          %931 = vmatprep.subr.bf16.mxu0 0
          %932 = vmatpush2.bf16.msra.mxu0 0
          %933 = vmatprep.subr.bf16.mxu0 0
          %934 = vmatpush2.bf16.msra.mxu0 0
          %935 = vmatprep.subr.bf16.mxu0 0
          %936 = vmatpush2.bf16.msra.mxu0 0
          %937 = vmatprep.subr.bf16.mxu0 0
          %938 = vmatpush2.bf16.msra.mxu0 0
          %939 = vmatprep.subr.bf16.mxu0 0
          %940 = vmatpush2.bf16.msra.mxu0 0
          %941 = vmatprep.subr.bf16.mxu0 0
          %942 = vmatpush2.bf16.msra.mxu0 0
          %943 = vmatprep.subr.bf16.mxu0 0
          %944 = vmatpush2.bf16.msra.mxu0 0
          %945 = vmatprep.subr.bf16.mxu0 0
          %946 = vmatpush2.bf16.msra.mxu0 0
          %947 = vmatprep.mubr.bf16.mxu0 0
          %948 = vmatmul.mubr.bf16.gmra.mxu0 %v754
          %v949 = vpop.f32.mrf.mxu0
          %v950 = vadd.f32 0.0, %v949
          %v951 = vpop.f32.mrf.mxu0
          %v952 = vadd.f32 0.0, %v951
          %v953 = vpop.f32.mrf.mxu0
          %v954 = vpop.f32.mrf.mxu0
          %955 = vdwg.mxu0
          %956 = vmatprep.subr.bf16.mxu0 %v882
          %957 = vmatpush1.bf16.msra.mxu0 %v881
          %958 = vmatprep.subr.bf16.mxu0 %v878
          %959 = vmatpush1.bf16.msra.mxu0 %v877
          %960 = vmatprep.subr.bf16.mxu0 %v874
          %961 = vmatpush1.bf16.msra.mxu0 %v873
          %962 = vmatprep.subr.bf16.mxu0 %v870
          %963 = vmatpush1.bf16.msra.mxu0 %v869
          %964 = vmatprep.subr.bf16.mxu0 %v866
          %965 = vmatpush1.bf16.msra.mxu0 %v865
          %966 = vmatprep.subr.bf16.mxu0 %v862
          %967 = vmatpush1.bf16.msra.mxu0 %v861
          %968 = vmatprep.subr.bf16.mxu0 %v858
          %969 = vmatpush1.bf16.msra.mxu0 %v857
          %970 = vmatprep.subr.bf16.mxu0 %v854
          %971 = vmatpush1.bf16.msra.mxu0 %v853
          %972 = vmatprep.subr.bf16.mxu0 0
          %973 = vmatpush2.bf16.msra.mxu0 0
          %974 = vmatprep.subr.bf16.mxu0 0
          %975 = vmatpush2.bf16.msra.mxu0 0
          %976 = vmatprep.subr.bf16.mxu0 0
          %977 = vmatpush2.bf16.msra.mxu0 0
          %978 = vmatprep.subr.bf16.mxu0 0
          %979 = vmatpush2.bf16.msra.mxu0 0
          %980 = vmatprep.subr.bf16.mxu0 0
          %981 = vmatpush2.bf16.msra.mxu0 0
          %982 = vmatprep.subr.bf16.mxu0 0
          %983 = vmatpush2.bf16.msra.mxu0 0
          %984 = vmatprep.subr.bf16.mxu0 0
          %985 = vmatpush2.bf16.msra.mxu0 0
          %986 = vmatprep.subr.bf16.mxu0 0
          %987 = vmatpush2.bf16.msra.mxu0 0
          %988 = vmatprep.mubr.bf16.mxu0 0
          %989 = vmatmul.mubr.bf16.gmra.mxu0 %v754
          %v990 = vpop.f32.mrf.mxu0
          %v991 = vadd.f32 0.0, %v990
          %v992 = vpop.f32.mrf.mxu0
          %v993 = vadd.f32 0.0, %v992
          %v994 = vpop.f32.mrf.mxu0
          %v995 = vpop.f32.mrf.mxu0
          %996 = vdwg.mxu0
          %v997 = vadd.f32 %v750, %v950
          %v998 = vadd.f32 %v751, %v952
          %v999 = vadd.f32 %v752, %v991
          %v1000 = vadd.f32 %v753, %v993
          %v1001 = vxor.u32 %v997, 2147483648
          %v1002 = vxor.u32 %v998, 2147483648
          %v1003 = vxor.u32 %v999, 2147483648
          %v1004 = vmul.f32 %v1001, 1.442695
          %v1005 = vpow.pop %v1004
          %v1006 = vmul.f32 %v1002, 1.442695
          %v1007 = vpow.pop %v1006
          %v1008 = vmul.f32 %v1003, 1.442695
          %v1009 = vpow.pop %v1008
          %v1010 = vadd.f32 %v1005, 1.0
          %v1011 = vadd.f32 %v1007, 1.0
          %v1012 = vadd.f32 %v1009, 1.0
          %v1013 = vrcp.pop %v1010
          %v1014 = vmul.f32 1.0, %v1013
          %v1015 = vrcp.pop %v1011
          %v1016 = vmul.f32 1.0, %v1015
          %v1017 = vrcp.pop %v1012
          %v1018 = vmul.f32 1.0, %v1017
          %v1019 = vtanh.pop %v1000
          %v1020 = vmul.f32 %v1016, %v739
          %v1021 = vmul.f32 %v1014, %v1019
          %v1022 = vadd.f32 %v1020, %v1021
          %v1023 = vtanh.pop %v1022
          %v1024 = vmul.f32 %v1018, %v1023
          %s1025 = scalar_lea.vmem %s363, %s744 [#allocation11]
          %1026 = vst [vmem:[%s1025] sm:$0xff] %v1024
        $region57: #{tpu_custom_call.1} parent=35 // loop_footer
          %s737 = sadd.s32 1, %s733
        $region58: #{tpu_custom_call.1} parent=35 // loop_footer_branch
          %732 = sbr.rel target = $region54
        $region59: #{tpu_custom_call.1} parent=35 // loop_exit
          _
        %1027 = vst [vmem:[%s370] sm:$0xff] %v738
        %1028 = vst [vmem:[%s377] sm:$0xff] %v739
        %s1029 = sand.u32 %s138, 1
        %s1030 = scalar_lea.sflag [#allocation5], %s1029
        %s1031 = sand.u32 %s138, 1
        %s1032 = smul.addr %s1031, 64
        %s1033 = scalar_lea.vmem [#allocation11], %s1032
        %s1034 = sand.u32 %s31, 1
        %s1035 = scalar_lea.sflag [#allocation13], %s1034
        %s1036 = sand.u32 %s164, 1
        %s1037 = smul.addr %s1036, 8
        %s1038 = scalar_lea.vmem [#allocation12], %s1037
        %s1039 = sand.u32 %s31, 1
        %s1040 = scalar_lea.sflag [#allocation13], %s1039
        %s1041 = sand.u32 %s190, 1
        %s1042 = smul.addr %s1041, 8
        %s1043 = scalar_lea.vmem [#allocation14], %s1042
        // Predicated region
        $region60: #{tpu_custom_call.1} parent=35 // pred_check
          %p1044 = pneg %p148
        $region61: #{tpu_custom_call.1} parent=35 // pred_check_branch
          %1046 = sbr.rel (%p1044) target = $region63
        $region62: #{tpu_custom_call.1} parent=35 // pred_region
          %s1048 = ssub.s32 1024, 1024
          %1049 = vsyncadd %s1030, %s1048
          %s1050 = smul.addr %s31, 128
          %s1051 = scalar_lea.hbm %s4, %s1050
          %s1052 = sshll.u32 %s1033, 4
          %s1053 = int_to_ptr.vmem [resolvable:$true] %s1052
          %1058 = dma.vmem_to_hbm [thread:$0]  %s1053, 1024, %s1051, %s1030, 128, 256, 8
        $region63: #{tpu_custom_call.1} parent=35 // pred_fallthru
          _
        // Predicated region
        $region64: #{tpu_custom_call.1} parent=35 // pred_check
          %p1059 = pneg %p174
        $region65: #{tpu_custom_call.1} parent=35 // pred_check_branch
          %1061 = sbr.rel (%p1059) target = $region67
        $region66: #{tpu_custom_call.1} parent=35 // pred_region
          %s1063 = ssub.s32 128, 128
          %1064 = vsyncadd %s1035, %s1063
          %s1065 = smul.addr %s31, 128
          %s1066 = scalar_lea.hbm %s5, %s1065
          %s1068 = sshll.u32 %s1038, 4
          %s1069 = int_to_ptr.vmem [resolvable:$true] %s1068
          %1071 = dma.vmem_to_hbm [thread:$0]  %s1069, 128, %s1066, %s1035
        $region67: #{tpu_custom_call.1} parent=35 // pred_fallthru
          _
        // Predicated region
        $region68: #{tpu_custom_call.1} parent=35 // pred_check
          %p1072 = pneg %p200
        $region69: #{tpu_custom_call.1} parent=35 // pred_check_branch
          %1074 = sbr.rel (%p1072) target = $region71
        $region70: #{tpu_custom_call.1} parent=35 // pred_region
          %s1076 = ssub.s32 128, 128
          %1077 = vsyncadd %s1040, %s1076
          %s1078 = smul.addr %s31, 128
          %s1079 = scalar_lea.hbm %s6, %s1078
          %s1081 = sshll.u32 %s1043, 4
          %s1082 = int_to_ptr.vmem [resolvable:$true] %s1081
          %1084 = dma.vmem_to_hbm [thread:$0]  %s1082, 128, %s1079, %s1040
        $region71: #{tpu_custom_call.1} parent=35 // pred_fallthru
          _
      $region36: #{tpu_custom_call.1} parent=5 // pred_fallthru
        _
      %p1085 = scmp.le.s32.totalorder 2, %s26
      // Predicated region
      $region72: #{tpu_custom_call.1} parent=5 // pred_check
        %p1086 = pneg %p1085
      $region73: #{tpu_custom_call.1} parent=5 // pred_check_branch
        %1088 = sbr.rel (%p1086) target = $region75
      $region74: #{tpu_custom_call.1} parent=5 // pred_region
        %s1089 = ssub.s32 %s26, 2
        // Predicated region
        $region76: #{tpu_custom_call.1} parent=74 // pred_check
          %p1090 = pneg %p154
        $region77: #{tpu_custom_call.1} parent=74 // pred_check_branch
          %1092 = sbr.rel (%p1090) target = $region79
        $region78: #{tpu_custom_call.1} parent=74 // pred_region
          %s1093 = sand.u32 %s139, 1
          %s1094 = scalar_lea.sflag [#allocation5], %s1093
          %s1095 = sand.u32 %s139, 1
          %s1096 = smul.addr %s1095, 64
          %s1097 = scalar_lea.vmem [#allocation11], %s1096
          %1098 = dma.done %s1094, 1024
        $region79: #{tpu_custom_call.1} parent=74 // pred_fallthru
          _
        // Predicated region
        $region80: #{tpu_custom_call.1} parent=74 // pred_check
          %p1099 = pneg %p180
        $region81: #{tpu_custom_call.1} parent=74 // pred_check_branch
          %1101 = sbr.rel (%p1099) target = $region83
        $region82: #{tpu_custom_call.1} parent=74 // pred_region
          %s1102 = sand.u32 %s32, 1
          %s1103 = scalar_lea.sflag [#allocation13], %s1102
          %s1104 = sand.u32 %s165, 1
          %s1105 = smul.addr %s1104, 8
          %s1106 = scalar_lea.vmem [#allocation12], %s1105
          %1107 = dma.done %s1103, 128
        $region83: #{tpu_custom_call.1} parent=74 // pred_fallthru
          _
        // Predicated region
        $region84: #{tpu_custom_call.1} parent=74 // pred_check
          %p1108 = pneg %p206
        $region85: #{tpu_custom_call.1} parent=74 // pred_check_branch
          %1110 = sbr.rel (%p1108) target = $region87
        $region86: #{tpu_custom_call.1} parent=74 // pred_region
          %s1111 = sand.u32 %s32, 1
          %s1112 = scalar_lea.sflag [#allocation13], %s1111
          %s1113 = sand.u32 %s191, 1
          %s1114 = smul.addr %s1113, 8
          %s1115 = scalar_lea.vmem [#allocation14], %s1114
          %1116 = dma.done %s1112, 128
        $region87: #{tpu_custom_call.1} parent=74 // pred_fallthru
          _
      $region75: #{tpu_custom_call.1} parent=5 // pred_fallthru
        _
    $region6: #{tpu_custom_call.1} parent=1 // loop_footer
      %s30 = sadd.s32 1, %s26
    $region7: #{tpu_custom_call.1} parent=1 // loop_footer_branch
      %25 = sbr.rel target = $region3
    $region8: #{tpu_custom_call.1} parent=1 // loop_exit
      _
    %1117 = vsyncpa [#allocation4], 1
    %s1118 = scalar_lea.sflag [#allocation4], 1
    %1119 = vsyncpa %s1118, 1
    %1120 = vsyncpa [#allocation7], 1
    %s1121 = scalar_lea.sflag [#allocation7], 1
    %1122 = vsyncpa %s1121, 1
    %1123 = vsyncpa [#allocation10], 1
    %s1124 = scalar_lea.sflag [#allocation10], 1
    %1125 = vsyncpa %s1124, 1
    %1126 = vsyncpa [#allocation5], 1
    %s1127 = scalar_lea.sflag [#allocation5], 1
    %1128 = vsyncpa %s1127, 1
    %1129 = vsyncpa [#allocation13], 1
    %s1130 = scalar_lea.sflag [#allocation13], 1
    %1131 = vsyncpa %s1130, 1

</llo_original>
